<compile_context>
chip_gen: v5e
topology: v5e:2x2
jax: 0.10.0
libtpu: 0.0.40
codegen_flags: <defaults>
</compile_context>

<pallas_src>
import math
import functools

import jax
import jax.numpy as jnp
from jax.experimental import pallas as pl
from jax.experimental.pallas import tpu as pltpu


def _embed_gather_kernel(ids_ref, table_ref, o_ref, rows, sems, *, scale, T, W):
    """Gather + scale T tokens per grid step.

    ids_ref:   (N_pad,) int32 in SMEM (scalar-prefetched, flattened, pre-clamped ids)
    table_ref: (V, D) embedding table (VMEM-resident block or raw HBM ref)
    o_ref:     (T, D) output block in VMEM
    rows:      (T, D) VMEM scratch the gathered rows land in
    sems:      (W,) DMA semaphores -> W row copies in flight at once
    """
    base = pl.program_id(0) * T
    n_ids = ids_ref.shape[0]

    def copy_for(j, row, slot):
        return pltpu.make_async_copy(
            table_ref.at[pl.ds(row, 1), :],
            rows.at[pl.ds(j, 1), :],
            sems.at[slot],
        )

    # Prime the window: W row fetches in flight before any wait.
    for j in range(W):  # static unroll, W <= 8
        copy_for(j, ids_ref[base + j], j).start()

    def body(j, carry):
        slot = jax.lax.rem(j, W)
        # Read ids from SMEM *before* the DMA wait (wait breaks sst->sld forwarding).
        row_j = ids_ref[base + j]
        nxt = jnp.minimum(base + j + W, n_ids - 1)
        row_next = ids_ref[nxt]
        # Wait for row j; descriptor matches the one issued for row j exactly.
        copy_for(j, row_j, slot).wait()
        # Keep the window full: fetch row j+W into the slot we just drained.
        @pl.when(j + W < T)
        def _():
            copy_for(j + W, row_next, slot).start()
        return carry

    jax.lax.fori_loop(0, T, body, 0)

    # Single full-block scale + store: dense vector ops, f32 math, one cast.
    o_ref[...] = (rows[...].astype(jnp.float32) * scale).astype(o_ref.dtype)


def input_embeddings(token_ids, emb_table, *, tokens_per_step=256,
                     out_dtype=None, table_in_vmem=None):
    """token_ids: (B, S) int, emb_table: (V, D) -> (B, S, D) in `out_dtype`.

    Equivalent to torch: nn.Embedding(V, D)(x) * sqrt(d_model).
    """
    B, S = token_ids.shape
    V, D = emb_table.shape
    N = B * S
    out_dtype = emb_table.dtype if out_dtype is None else jnp.dtype(out_dtype)

    # Pick the token-block size T: (8,128)-legal and, if possible, dividing N so we
    # never need a post-kernel slice (which would copy the whole output in HBM).
    if N <= tokens_per_step:
        T = N                                    # single block == full array (always legal)
    else:
        T = max(8, (min(tokens_per_step, N) // 8) * 8)
        divs = [d for d in range(T, 7, -8) if N % d == 0]
        if divs and divs[0] >= T // 2:
            T = divs[0]
    n_blocks = pl.cdiv(N, T)
    N_pad = n_blocks * T

    ids_flat = jnp.clip(token_ids.reshape(N).astype(jnp.int32), 0, V - 1)
    if N_pad != N:
        ids_flat = jnp.pad(ids_flat, (0, N_pad - N))   # padded ids gather row 0, dropped below

    # Table placement: small tables ride one bulk DMA into VMEM and stay resident;
    # large tables stay in HBM and are row-gathered. Threshold keeps the whole
    # footprint (double-buffered table + blocks) under the default scoped-VMEM limit
    # on every generation (raise vmem_limit_bytes if you want a bigger VMEM table).
    if table_in_vmem is None:
        table_bytes = emb_table.size * emb_table.dtype.itemsize
        block_bytes = 3 * T * D * max(emb_table.dtype.itemsize, out_dtype.itemsize)
        table_in_vmem = (2 * table_bytes + block_bytes) <= (12 << 20)
    if table_in_vmem:
        table_spec = pl.BlockSpec((V, D), lambda t, ids: (0, 0))   # resident, fetched once
    else:
        table_spec = pl.BlockSpec(memory_space=pl.ANY)             # raw HBM ref

    W = min(8, T)  # outstanding row DMAs per block
    kernel = functools.partial(_embed_gather_kernel, scale=math.sqrt(D), T=T, W=W)

    out = pl.pallas_call(
        kernel,
        out_shape=jax.ShapeDtypeStruct((N_pad, D), out_dtype),
        grid_spec=pltpu.PrefetchScalarGridSpec(
            num_scalar_prefetch=1,                       # token ids -> SMEM
            grid=(n_blocks,),
            in_specs=[table_spec],
            out_specs=pl.BlockSpec((T, D), lambda t, ids: (t, 0)),
            scratch_shapes=[
                pltpu.VMEM((T, D), emb_table.dtype),     # gathered rows
                pltpu.SemaphoreType.DMA((W,)),           # DMA window
            ],
        ),
        compiler_params=pltpu.CompilerParams(
            dimension_semantics=("parallel",)),          # blocks independent (2 TCs on v7x)
    )(ids_flat, emb_table)

    if N_pad != N:
        out = out[:N]
    return out.reshape(B, S, D)


if __name__ == "__main__":
    # Small, lane-aligned shapes consistent with the module.
    B, S = 2, 8
    D, V = 128, 512

    key = jax.random.PRNGKey(0)
    kt, ki = jax.random.split(key)
    table = jax.random.normal(kt, (V, D), jnp.float32)
    ids = jax.random.randint(ki, (B, S), 0, V, dtype=jnp.int32)

    ref = jnp.take(table, ids, axis=0) * math.sqrt(D)

    # Path 1: force the HBM row-DMA gather path, multi-block grid (exercises the
    # DMA window + pipelining across 2 grid steps).
    out_hbm = input_embeddings(ids, table, tokens_per_step=8, table_in_vmem=False)
    jax.block_until_ready(out_hbm)
    assert out_hbm.shape == (B, S, D), out_hbm.shape
    assert jnp.all(jnp.isfinite(out_hbm))
    assert jnp.allclose(out_hbm, ref, rtol=1e-6, atol=1e-6), \
        float(jnp.max(jnp.abs(out_hbm - ref)))

    # Path 2: default config -> 256 KiB table auto-staged in VMEM, single block.
    out_vmem = input_embeddings(ids, table)
    jax.block_until_ready(out_vmem)
    assert out_vmem.shape == (B, S, D), out_vmem.shape
    assert jnp.allclose(out_vmem, ref, rtol=1e-6, atol=1e-6), \
        float(jnp.max(jnp.abs(out_vmem - ref)))

    print("KERNEL_OK")
</pallas_src>

<mosaic_0001>
module attributes {stable_mosaic.version = 11 : i64} {
  func.func @_embed_gather_kernel(%arg0: i32, %arg1: memref<16xi32, #tpu.memory_space<smem>>, %arg2: memref<512x128xf32, #tpu.memory_space<any>>, %arg3: memref<8x128xf32, #tpu.memory_space<vmem>>, %arg4: memref<8x128xf32, #tpu.memory_space<vmem>>, %arg5: memref<8x!tpu.dma_semaphore, #tpu.memory_space<semaphore_mem>>) attributes {dimension_semantics = [#tpu.dimension_semantics<parallel>], iteration_bounds = array<i64: 2>, scalar_prefetch = 1 : i64, scratch_operands = 2 : i64, tpu.core_type = #tpu.core_type<tc>, window_params = [{}, {transform_indices = @transform_1, window_bounds = array<i64: 8, 128>}]} {
    %c8_i32 = arith.constant 8 : i32
    %0 = arith.muli %arg0, %c8_i32 : i32
    %c0_i32 = arith.constant 0 : i32
    %1 = arith.addi %0, %c0_i32 : i32
    %2 = arith.index_cast %1 : i32 to index
    %3 = memref.load %arg1[%2] : memref<16xi32, #tpu.memory_space<smem>>
    %c0_i32_0 = arith.constant 0 : i32
    %c0_i32_1 = arith.constant 0 : i32
    %4 = tpu.memref_slice %arg2[%3, %c0_i32_1] : memref<512x128xf32, #tpu.memory_space<any>> -> memref<1x128xf32, #tpu.memory_space<any>>
    %c0_i32_2 = arith.constant 0 : i32
    %c0_i32_3 = arith.constant 0 : i32
    %5 = tpu.memref_slice %arg4[%c0_i32_2, %c0_i32_3] : memref<8x128xf32, #tpu.memory_space<vmem>> -> memref<1x128xf32, #tpu.memory_space<vmem>>
    %6 = tpu.memref_slice %arg5[%c0_i32_0] : memref<8x!tpu.dma_semaphore, #tpu.memory_space<semaphore_mem>> -> memref<1x!tpu.dma_semaphore, #tpu.memory_space<semaphore_mem>>
    %7 = tpu.memref_squeeze %6 : memref<1x!tpu.dma_semaphore, #tpu.memory_space<semaphore_mem>> -> memref<!tpu.dma_semaphore, #tpu.memory_space<semaphore_mem>>
    tpu.enqueue_dma source(%4 : memref<1x128xf32, #tpu.memory_space<any>>) target(%5 : memref<1x128xf32, #tpu.memory_space<vmem>>) target_semaphore(%7 : memref<!tpu.dma_semaphore, #tpu.memory_space<semaphore_mem>>)
    %c1_i32 = arith.constant 1 : i32
    %8 = arith.addi %0, %c1_i32 : i32
    %9 = arith.index_cast %8 : i32 to index
    %10 = memref.load %arg1[%9] : memref<16xi32, #tpu.memory_space<smem>>
    %c1_i32_4 = arith.constant 1 : i32
    %c0_i32_5 = arith.constant 0 : i32
    %11 = tpu.memref_slice %arg2[%10, %c0_i32_5] : memref<512x128xf32, #tpu.memory_space<any>> -> memref<1x128xf32, #tpu.memory_space<any>>
    %c1_i32_6 = arith.constant 1 : i32
    %c0_i32_7 = arith.constant 0 : i32
    %12 = tpu.memref_slice %arg4[%c1_i32_6, %c0_i32_7] : memref<8x128xf32, #tpu.memory_space<vmem>> -> memref<1x128xf32, #tpu.memory_space<vmem>>
    %13 = tpu.memref_slice %arg5[%c1_i32_4] : memref<8x!tpu.dma_semaphore, #tpu.memory_space<semaphore_mem>> -> memref<1x!tpu.dma_semaphore, #tpu.memory_space<semaphore_mem>>
    %14 = tpu.memref_squeeze %13 : memref<1x!tpu.dma_semaphore, #tpu.memory_space<semaphore_mem>> -> memref<!tpu.dma_semaphore, #tpu.memory_space<semaphore_mem>>
    tpu.enqueue_dma source(%11 : memref<1x128xf32, #tpu.memory_space<any>>) target(%12 : memref<1x128xf32, #tpu.memory_space<vmem>>) target_semaphore(%14 : memref<!tpu.dma_semaphore, #tpu.memory_space<semaphore_mem>>)
    %c2_i32 = arith.constant 2 : i32
    %15 = arith.addi %0, %c2_i32 : i32
    %16 = arith.index_cast %15 : i32 to index
    %17 = memref.load %arg1[%16] : memref<16xi32, #tpu.memory_space<smem>>
    %c2_i32_8 = arith.constant 2 : i32
    %c0_i32_9 = arith.constant 0 : i32
    %18 = tpu.memref_slice %arg2[%17, %c0_i32_9] : memref<512x128xf32, #tpu.memory_space<any>> -> memref<1x128xf32, #tpu.memory_space<any>>
    %c2_i32_10 = arith.constant 2 : i32
    %c0_i32_11 = arith.constant 0 : i32
    %19 = tpu.memref_slice %arg4[%c2_i32_10, %c0_i32_11] : memref<8x128xf32, #tpu.memory_space<vmem>> -> memref<1x128xf32, #tpu.memory_space<vmem>>
    %20 = tpu.memref_slice %arg5[%c2_i32_8] : memref<8x!tpu.dma_semaphore, #tpu.memory_space<semaphore_mem>> -> memref<1x!tpu.dma_semaphore, #tpu.memory_space<semaphore_mem>>
    %21 = tpu.memref_squeeze %20 : memref<1x!tpu.dma_semaphore, #tpu.memory_space<semaphore_mem>> -> memref<!tpu.dma_semaphore, #tpu.memory_space<semaphore_mem>>
    tpu.enqueue_dma source(%18 : memref<1x128xf32, #tpu.memory_space<any>>) target(%19 : memref<1x128xf32, #tpu.memory_space<vmem>>) target_semaphore(%21 : memref<!tpu.dma_semaphore, #tpu.memory_space<semaphore_mem>>)
    %c3_i32 = arith.constant 3 : i32
    %22 = arith.addi %0, %c3_i32 : i32
    %23 = arith.index_cast %22 : i32 to index
    %24 = memref.load %arg1[%23] : memref<16xi32, #tpu.memory_space<smem>>
    %c3_i32_12 = arith.constant 3 : i32
    %c0_i32_13 = arith.constant 0 : i32
    %25 = tpu.memref_slice %arg2[%24, %c0_i32_13] : memref<512x128xf32, #tpu.memory_space<any>> -> memref<1x128xf32, #tpu.memory_space<any>>
    %c3_i32_14 = arith.constant 3 : i32
    %c0_i32_15 = arith.constant 0 : i32
    %26 = tpu.memref_slice %arg4[%c3_i32_14, %c0_i32_15] : memref<8x128xf32, #tpu.memory_space<vmem>> -> memref<1x128xf32, #tpu.memory_space<vmem>>
    %27 = tpu.memref_slice %arg5[%c3_i32_12] : memref<8x!tpu.dma_semaphore, #tpu.memory_space<semaphore_mem>> -> memref<1x!tpu.dma_semaphore, #tpu.memory_space<semaphore_mem>>
    %28 = tpu.memref_squeeze %27 : memref<1x!tpu.dma_semaphore, #tpu.memory_space<semaphore_mem>> -> memref<!tpu.dma_semaphore, #tpu.memory_space<semaphore_mem>>
    tpu.enqueue_dma source(%25 : memref<1x128xf32, #tpu.memory_space<any>>) target(%26 : memref<1x128xf32, #tpu.memory_space<vmem>>) target_semaphore(%28 : memref<!tpu.dma_semaphore, #tpu.memory_space<semaphore_mem>>)
    %c4_i32 = arith.constant 4 : i32
    %29 = arith.addi %0, %c4_i32 : i32
    %30 = arith.index_cast %29 : i32 to index
    %31 = memref.load %arg1[%30] : memref<16xi32, #tpu.memory_space<smem>>
    %c4_i32_16 = arith.constant 4 : i32
    %c0_i32_17 = arith.constant 0 : i32
    %32 = tpu.memref_slice %arg2[%31, %c0_i32_17] : memref<512x128xf32, #tpu.memory_space<any>> -> memref<1x128xf32, #tpu.memory_space<any>>
    %c4_i32_18 = arith.constant 4 : i32
    %c0_i32_19 = arith.constant 0 : i32
    %33 = tpu.memref_slice %arg4[%c4_i32_18, %c0_i32_19] : memref<8x128xf32, #tpu.memory_space<vmem>> -> memref<1x128xf32, #tpu.memory_space<vmem>>
    %34 = tpu.memref_slice %arg5[%c4_i32_16] : memref<8x!tpu.dma_semaphore, #tpu.memory_space<semaphore_mem>> -> memref<1x!tpu.dma_semaphore, #tpu.memory_space<semaphore_mem>>
    %35 = tpu.memref_squeeze %34 : memref<1x!tpu.dma_semaphore, #tpu.memory_space<semaphore_mem>> -> memref<!tpu.dma_semaphore, #tpu.memory_space<semaphore_mem>>
    tpu.enqueue_dma source(%32 : memref<1x128xf32, #tpu.memory_space<any>>) target(%33 : memref<1x128xf32, #tpu.memory_space<vmem>>) target_semaphore(%35 : memref<!tpu.dma_semaphore, #tpu.memory_space<semaphore_mem>>)
    %c5_i32 = arith.constant 5 : i32
    %36 = arith.addi %0, %c5_i32 : i32
    %37 = arith.index_cast %36 : i32 to index
    %38 = memref.load %arg1[%37] : memref<16xi32, #tpu.memory_space<smem>>
    %c5_i32_20 = arith.constant 5 : i32
    %c0_i32_21 = arith.constant 0 : i32
    %39 = tpu.memref_slice %arg2[%38, %c0_i32_21] : memref<512x128xf32, #tpu.memory_space<any>> -> memref<1x128xf32, #tpu.memory_space<any>>
    %c5_i32_22 = arith.constant 5 : i32
    %c0_i32_23 = arith.constant 0 : i32
    %40 = tpu.memref_slice %arg4[%c5_i32_22, %c0_i32_23] : memref<8x128xf32, #tpu.memory_space<vmem>> -> memref<1x128xf32, #tpu.memory_space<vmem>>
    %41 = tpu.memref_slice %arg5[%c5_i32_20] : memref<8x!tpu.dma_semaphore, #tpu.memory_space<semaphore_mem>> -> memref<1x!tpu.dma_semaphore, #tpu.memory_space<semaphore_mem>>
    %42 = tpu.memref_squeeze %41 : memref<1x!tpu.dma_semaphore, #tpu.memory_space<semaphore_mem>> -> memref<!tpu.dma_semaphore, #tpu.memory_space<semaphore_mem>>
    tpu.enqueue_dma source(%39 : memref<1x128xf32, #tpu.memory_space<any>>) target(%40 : memref<1x128xf32, #tpu.memory_space<vmem>>) target_semaphore(%42 : memref<!tpu.dma_semaphore, #tpu.memory_space<semaphore_mem>>)
    %c6_i32 = arith.constant 6 : i32
    %43 = arith.addi %0, %c6_i32 : i32
    %44 = arith.index_cast %43 : i32 to index
    %45 = memref.load %arg1[%44] : memref<16xi32, #tpu.memory_space<smem>>
    %c6_i32_24 = arith.constant 6 : i32
    %c0_i32_25 = arith.constant 0 : i32
    %46 = tpu.memref_slice %arg2[%45, %c0_i32_25] : memref<512x128xf32, #tpu.memory_space<any>> -> memref<1x128xf32, #tpu.memory_space<any>>
    %c6_i32_26 = arith.constant 6 : i32
    %c0_i32_27 = arith.constant 0 : i32
    %47 = tpu.memref_slice %arg4[%c6_i32_26, %c0_i32_27] : memref<8x128xf32, #tpu.memory_space<vmem>> -> memref<1x128xf32, #tpu.memory_space<vmem>>
    %48 = tpu.memref_slice %arg5[%c6_i32_24] : memref<8x!tpu.dma_semaphore, #tpu.memory_space<semaphore_mem>> -> memref<1x!tpu.dma_semaphore, #tpu.memory_space<semaphore_mem>>
    %49 = tpu.memref_squeeze %48 : memref<1x!tpu.dma_semaphore, #tpu.memory_space<semaphore_mem>> -> memref<!tpu.dma_semaphore, #tpu.memory_space<semaphore_mem>>
    tpu.enqueue_dma source(%46 : memref<1x128xf32, #tpu.memory_space<any>>) target(%47 : memref<1x128xf32, #tpu.memory_space<vmem>>) target_semaphore(%49 : memref<!tpu.dma_semaphore, #tpu.memory_space<semaphore_mem>>)
    %c7_i32 = arith.constant 7 : i32
    %50 = arith.addi %0, %c7_i32 : i32
    %51 = arith.index_cast %50 : i32 to index
    %52 = memref.load %arg1[%51] : memref<16xi32, #tpu.memory_space<smem>>
    %c7_i32_28 = arith.constant 7 : i32
    %c0_i32_29 = arith.constant 0 : i32
    %53 = tpu.memref_slice %arg2[%52, %c0_i32_29] : memref<512x128xf32, #tpu.memory_space<any>> -> memref<1x128xf32, #tpu.memory_space<any>>
    %c7_i32_30 = arith.constant 7 : i32
    %c0_i32_31 = arith.constant 0 : i32
    %54 = tpu.memref_slice %arg4[%c7_i32_30, %c0_i32_31] : memref<8x128xf32, #tpu.memory_space<vmem>> -> memref<1x128xf32, #tpu.memory_space<vmem>>
    %55 = tpu.memref_slice %arg5[%c7_i32_28] : memref<8x!tpu.dma_semaphore, #tpu.memory_space<semaphore_mem>> -> memref<1x!tpu.dma_semaphore, #tpu.memory_space<semaphore_mem>>
    %56 = tpu.memref_squeeze %55 : memref<1x!tpu.dma_semaphore, #tpu.memory_space<semaphore_mem>> -> memref<!tpu.dma_semaphore, #tpu.memory_space<semaphore_mem>>
    tpu.enqueue_dma source(%53 : memref<1x128xf32, #tpu.memory_space<any>>) target(%54 : memref<1x128xf32, #tpu.memory_space<vmem>>) target_semaphore(%56 : memref<!tpu.dma_semaphore, #tpu.memory_space<semaphore_mem>>)
    %c0_i32_32 = arith.constant 0 : i32
    %c8_i32_33 = arith.constant 8 : i32
    %57 = arith.addi %c0_i32_32, %c8_i32_33 : i32
    %c1_i32_34 = arith.constant 1 : i32
    scf.for %arg6 = %c0_i32_32 to %57 step %c1_i32_34  : i32 {
      %c8_i32_39 = arith.constant 8 : i32
      %62 = arith.remsi %arg6, %c8_i32_39 : i32
      %63 = arith.addi %0, %arg6 : i32
      %64 = arith.index_cast %63 : i32 to index
      %65 = memref.load %arg1[%64] : memref<16xi32, #tpu.memory_space<smem>>
      %66 = arith.addi %0, %arg6 : i32
      %c8_i32_40 = arith.constant 8 : i32
      %67 = arith.addi %66, %c8_i32_40 : i32
      %c15_i32 = arith.constant 15 : i32
      %68 = arith.minsi %67, %c15_i32 : i32
      %69 = arith.index_cast %68 : i32 to index
      %70 = memref.load %arg1[%69] : memref<16xi32, #tpu.memory_space<smem>>
      %c0_i32_41 = arith.constant 0 : i32
      %71 = tpu.memref_slice %arg2[%65, %c0_i32_41] : memref<512x128xf32, #tpu.memory_space<any>> -> memref<1x128xf32, #tpu.memory_space<any>>
      %c0_i32_42 = arith.constant 0 : i32
      %72 = tpu.memref_slice %arg4[%arg6, %c0_i32_42] : memref<8x128xf32, #tpu.memory_space<vmem>> -> memref<1x128xf32, #tpu.memory_space<vmem>>
      %73 = tpu.memref_slice %arg5[%62] : memref<8x!tpu.dma_semaphore, #tpu.memory_space<semaphore_mem>> -> memref<1x!tpu.dma_semaphore, #tpu.memory_space<semaphore_mem>>
      %74 = tpu.memref_squeeze %73 : memref<1x!tpu.dma_semaphore, #tpu.memory_space<semaphore_mem>> -> memref<!tpu.dma_semaphore, #tpu.memory_space<semaphore_mem>>
      tpu.wait_dma2 semaphore(%74 : memref<!tpu.dma_semaphore, #tpu.memory_space<semaphore_mem>>) src(%71 : memref<1x128xf32, #tpu.memory_space<any>>) dst(%72 : memref<1x128xf32, #tpu.memory_space<vmem>>)
      %c8_i32_43 = arith.constant 8 : i32
      %75 = arith.addi %arg6, %c8_i32_43 : i32
      %c8_i32_44 = arith.constant 8 : i32
      %76 = arith.cmpi slt, %75, %c8_i32_44 : i32
      %77 = arith.extui %76 : i1 to i32
      %c0_i32_45 = arith.constant 0 : i32
      %78 = arith.cmpi ne, %77, %c0_i32_45 : i32
      scf.if %78 {
        %c8_i32_46 = arith.constant 8 : i32
        %79 = arith.addi %arg6, %c8_i32_46 : i32
        %c0_i32_47 = arith.constant 0 : i32
        %80 = tpu.memref_slice %arg2[%70, %c0_i32_47] : memref<512x128xf32, #tpu.memory_space<any>> -> memref<1x128xf32, #tpu.memory_space<any>>
        %c0_i32_48 = arith.constant 0 : i32
        %81 = tpu.memref_slice %arg4[%79, %c0_i32_48] : memref<8x128xf32, #tpu.memory_space<vmem>> -> memref<1x128xf32, #tpu.memory_space<vmem>>
        %82 = tpu.memref_slice %arg5[%62] : memref<8x!tpu.dma_semaphore, #tpu.memory_space<semaphore_mem>> -> memref<1x!tpu.dma_semaphore, #tpu.memory_space<semaphore_mem>>
        %83 = tpu.memref_squeeze %82 : memref<1x!tpu.dma_semaphore, #tpu.memory_space<semaphore_mem>> -> memref<!tpu.dma_semaphore, #tpu.memory_space<semaphore_mem>>
        tpu.enqueue_dma source(%80 : memref<1x128xf32, #tpu.memory_space<any>>) target(%81 : memref<1x128xf32, #tpu.memory_space<vmem>>) target_semaphore(%83 : memref<!tpu.dma_semaphore, #tpu.memory_space<semaphore_mem>>)
      } else {
      }
    }
    %c8_i32_35 = arith.constant 8 : i32
    %c0 = arith.constant 0 : index
    %c0_36 = arith.constant 0 : index
    %58 = vector.load %arg4[%c0, %c0_36] : memref<8x128xf32, #tpu.memory_space<vmem>>, vector<8x128xf32>
    %cst = arith.constant 11.3137083 : f32
    %59 = vector.broadcast %cst : f32 to vector<8x128xf32>
    %60 = arith.mulf %58, %59 : vector<8x128xf32>
    %c0_37 = arith.constant 0 : index
    %c0_38 = arith.constant 0 : index
    %61 = vector.load %arg3[%c0_37, %c0_38] : memref<8x128xf32, #tpu.memory_space<vmem>>, vector<8x128xf32>
    tpu.vector_store %arg3[%c0_37, %c0_38], %60 {strides = array<i32>} : memref<8x128xf32, #tpu.memory_space<vmem>>, vector<8x128xf32>,
    return
  }
  func.func @transform_1(%arg0: i32, %arg1: memref<16xi32, #tpu.memory_space<smem>>) -> (i32, i32) {
    %c0_i32 = arith.constant 0 : i32
    %c0_i32_0 = arith.constant 0 : i32
    return %arg0, %c0_i32 : i32, i32
  }
}

</mosaic_0001>

<llo_original>
// kernel: tpu_custom_call.1
$region0: #{tpu_custom_call.1}
  #allocation0 [shape = 'u32[]', space=smem, size = 0x4, offset = 0x4, fixed_abs, tag = 'smem constant byte address 0x4 - core index']
  #allocation1 [shape = 'u32[72,128]{1,0:T(1,128)}', space=vmem, size = 0x9000, scoped, tag = 'internal scratch']
  #allocation2 [shape = 'f32[8,128]{1,0:T(8,128)}', space=vmem, size = 0x1000, scoped, tag = 'scratch operand']
  #allocation3 [shape = 's32[8]{0}', space=sflag, size = 0x20, scoped, tag = 'scratch operand']
  #allocation4 [shape = 's32[1]{0}', space=sflag, size = 0x4, scoped, tag = 'scoped memory for tpu_custom_call.1']
  #allocation5 [shape = 'u8[512]{0}', space=smem, size = 0x200, scoped, tag = 'prefetched SMEM operand 0']
  #allocation8 [shape = 's32[]', space=sflag, size = 0x4, offset = 0, fixed_abs, tag = 'sflag constant byte address 0x0 - dummy sync flag']
  #allocation9 [shape = 's32[]', space=sflag, size = 0x4, offset = 0, fixed_abs, tag = 'sflag constant byte address 0x0 - dummy sync flag']
  #allocation10 [shape = 'u32[]', space=smem, size = 0x4, offset = 0x44, fixed_abs, tag = 'smem constant byte address 0x44 - assertion arg 0']
  #allocation11 [shape = 'u32[]', space=smem, size = 0x4, offset = 0x48, fixed_abs, tag = 'smem constant byte address 0x48 - assertion arg 1']
  #allocation12 [shape = 's32[]', space=sflag, size = 0x4, offset = 0, fixed_abs, tag = 'sflag constant byte address 0x0 - dummy sync flag']
  #allocation13 [shape = 's32[]', space=sflag, size = 0x4, offset = 0, fixed_abs, tag = 'sflag constant byte address 0x0 - dummy sync flag']
  #allocation14 [shape = 's32[]', space=sflag, size = 0x4, offset = 0, fixed_abs, tag = 'sflag constant byte address 0x0 - dummy sync flag']
  #allocation15 [shape = 's32[]', space=sflag, size = 0x4, offset = 0, fixed_abs, tag = 'sflag constant byte address 0x0 - dummy sync flag']
  #allocation16 [shape = 's32[]', space=sflag, size = 0x4, offset = 0, fixed_abs, tag = 'sflag constant byte address 0x0 - dummy sync flag']
  #allocation17 [shape = 's32[]', space=sflag, size = 0x4, offset = 0, fixed_abs, tag = 'sflag constant byte address 0x0 - dummy sync flag']
  #allocation18 [shape = 's32[]', space=sflag, size = 0x4, offset = 0, fixed_abs, tag = 'sflag constant byte address 0x0 - dummy sync flag']
  #allocation19 [shape = 's32[]', space=sflag, size = 0x4, offset = 0, fixed_abs, tag = 'sflag constant byte address 0x0 - dummy sync flag']
  #allocation20 [shape = 's32[]', space=sflag, size = 0x4, offset = 0, fixed_abs, tag = 'sflag constant byte address 0x0 - dummy sync flag']
  #allocation21 [shape = 's32[]', space=sflag, size = 0x4, offset = 0, fixed_abs, tag = 'sflag constant byte address 0x0 - dummy sync flag']
  #allocation22 [shape = 's32[]', space=sflag, size = 0x4, offset = 0, fixed_abs, tag = 'sflag constant byte address 0x0 - dummy sync flag']
  #allocation23 [shape = 's32[]', space=sflag, size = 0x4, offset = 0, fixed_abs, tag = 'sflag constant byte address 0x0 - dummy sync flag']
  #allocation24 [shape = 's32[]', space=sflag, size = 0x4, offset = 0, fixed_abs, tag = 'sflag constant byte address 0x0 - dummy sync flag']
  #allocation25 [shape = 's32[]', space=sflag, size = 0x4, offset = 0, fixed_abs, tag = 'sflag constant byte address 0x0 - dummy sync flag']
  #allocation26 [shape = 's32[]', space=sflag, size = 0x4, offset = 0, fixed_abs, tag = 'sflag constant byte address 0x0 - dummy sync flag']
  #allocation27 [shape = 's32[]', space=sflag, size = 0x4, offset = 0, fixed_abs, tag = 'sflag constant byte address 0x0 - dummy sync flag']
  %s0 = inlined_call_operand.hbm [shape: s32[16], index: 0, kind: input, shape index: {}]
  %s1 = inlined_call_operand.hbm [shape: f32[512,128], index: 1, kind: input, shape index: {}]
  %s2 = inlined_call_operand.hbm [shape: f32[16,128], index: 2, kind: output, shape index: {}]
  %s3 = sld [smem:[#allocation0]]
  $region72: #{tpu_custom_call.1} parent=0
    _
  %s5 = ssub.s32 1, %s3
  %s6 = scalar_select 0, %s5, %s3
  %s8 = sshll.u32 %s0, 4
  %s9 = int_to_ptr.hbm [resolvable:$true] %s8
  %11 = dma.hbm_to_smem %s9, 16, [#allocation5], [#allocation4]
  %13 = dma.done [#allocation4], 16
  %14 = sfence
  $region1: #{tpu_custom_call.1} parent=0
    #allocation6 [shape = 'u8[8192]{0}', space=vmem, size = 0x2000, scoped, tag = 'output window, operand 0']
    #allocation7 [shape = 's32[2]{0}', space=sflag, size = 0x8, scoped, tag = 'scoped memory for tpu_custom_call.1']
    %15 = vsyncpa [#allocation7], 0
    %s16 = scalar_lea.sflag [#allocation7], 1
    %17 = vsyncpa %s16, 0
    loop: start=0, step=1, limit=3
    $region2: #{tpu_custom_call.1} parent=1 // loop_pre_header
      _
    $region3: #{tpu_custom_call.1} parent=1 // loop_header
      %s19 = sphi 0, %s23
      %p20 = scmp.ge.s32.totalorder %s19, 3
      %s28 = sphi 0, %s30
      %s31 = sphi 0, %s28
      %s41 = sphi 0, %s31
    $region4: #{tpu_custom_call.1} parent=1 // loop_header_branch
      %22 = sbr.rel (%p20) target = $region8
    $region5: #{tpu_custom_call.1} parent=1 // loop_body
      %s24 = ssub.s32 %s19, 1
      %s25 = sadd.s32 %s19, 1
      %s26 = ssub.s32 %s19, %s25
      %p27 = scmp.eq.s32.totalorder %s26, 0
      %s29 = sadd.s32 %s28, 1
      %s30 = scalar_select %p27, %s28, %s29
      %p32 = pneg %p27
      %p33 = scmp.eq.s32.totalorder %s19, 1
      %p34 = por %p32, %p33
      %p35 = scmp.ne.s32.totalorder %s28, %s31
      %p36 = scmp.eq.s32.totalorder %s19, 0
      %p37 = por %p35, %p36
      %p38 = scmp.ne.s32.totalorder %s28, %s31
      %p39 = scmp.eq.s32.totalorder %s24, 1
      %p40 = por %p38, %p39
      %p42 = scmp.ne.s32.totalorder %s31, %s41
      %p43 = scmp.eq.s32.totalorder %s24, 0
      %p44 = por %p42, %p43
      %p45 = scmp.lt.s32.totalorder %s19, 2
      // Predicated region
      $region9: #{tpu_custom_call.1} parent=5 // pred_check
        %p46 = pneg %p45
      $region10: #{tpu_custom_call.1} parent=5 // pred_check_branch
        %48 = sbr.rel (%p46) target = $region12
      $region11: #{tpu_custom_call.1} parent=5 // pred_region
        %p49 = pneg %p37
        %p50 = pneg %p34
        %s51 = sand.u32 %s28, 1
        %s52 = scalar_lea.sflag [#allocation7], %s51
        %s53 = sand.u32 %s28, 1
        %s54 = smul.addr %s53, 8
        %s55 = scalar_lea.vmem [#allocation6], %s54
        %s56 = smul.u32 %s19, 8
        %s57 = sld [smem:[#allocation5 + %s56]]
        %s58 = scalar_lea.hbm %s1, %s57
        // Predicated region
        $region13: #{tpu_custom_call.1} parent=11 // pred_check
          _
        $region14: #{tpu_custom_call.1} parent=11 // pred_check_branch
          %60 = sbr.rel target = $region16
        $region15: #{tpu_custom_call.1} parent=11 // pred_region
          %61 = sst [smem:[#allocation10]] [#allocation9]
          %62 = sst [smem:[#allocation11]] [#allocation8]
        $region16: #{tpu_custom_call.1} parent=11 // pred_fallthru
          _
        %64 = shalt.err (0)
        %s66 = sshll.u32 %s58, 4
        %s67 = int_to_ptr.hbm [resolvable:$true] %s66
        %s68 = sshll.u32 [#allocation2], 4
        %s69 = int_to_ptr.vmem [resolvable:$true] %s68
        %71 = dma.hbm_to_vmem [thread:$0]  %s67, 16, %s69, [#allocation3]
        %s72 = sadd.s32 %s56, 1
        %s73 = sld [smem:[#allocation5 + %s72]]
        %s74 = scalar_lea.hbm %s1, %s73
        %s75 = scalar_lea.vmem [#allocation2], 1
        %s76 = scalar_lea.sflag [#allocation3], 1
        // Predicated region
        $region17: #{tpu_custom_call.1} parent=11 // pred_check
          _
        $region18: #{tpu_custom_call.1} parent=11 // pred_check_branch
          %78 = sbr.rel target = $region20
        $region19: #{tpu_custom_call.1} parent=11 // pred_region
          %79 = sst [smem:[#allocation10]] [#allocation13]
          %80 = sst [smem:[#allocation11]] [#allocation12]
        $region20: #{tpu_custom_call.1} parent=11 // pred_fallthru
          _
        %82 = shalt.err (0)
        %s84 = sshll.u32 %s74, 4
        %s85 = int_to_ptr.hbm [resolvable:$true] %s84
        %s86 = sshll.u32 %s75, 4
        %s87 = int_to_ptr.vmem [resolvable:$true] %s86
        %89 = dma.hbm_to_vmem [thread:$0]  %s85, 16, %s87, %s76
        %s90 = sadd.s32 %s56, 2
        %s91 = sld [smem:[#allocation5 + %s90]]
        %s92 = scalar_lea.hbm %s1, %s91
        %s93 = scalar_lea.vmem [#allocation2], 2
        %s94 = scalar_lea.sflag [#allocation3], 2
        // Predicated region
        $region21: #{tpu_custom_call.1} parent=11 // pred_check
          _
        $region22: #{tpu_custom_call.1} parent=11 // pred_check_branch
          %96 = sbr.rel target = $region24
        $region23: #{tpu_custom_call.1} parent=11 // pred_region
          %97 = sst [smem:[#allocation10]] [#allocation15]
          %98 = sst [smem:[#allocation11]] [#allocation14]
        $region24: #{tpu_custom_call.1} parent=11 // pred_fallthru
          _
        %100 = shalt.err (0)
        %s102 = sshll.u32 %s92, 4
        %s103 = int_to_ptr.hbm [resolvable:$true] %s102
        %s104 = sshll.u32 %s93, 4
        %s105 = int_to_ptr.vmem [resolvable:$true] %s104
        %107 = dma.hbm_to_vmem [thread:$0]  %s103, 16, %s105, %s94
        %s108 = sadd.s32 %s56, 3
        %s109 = sld [smem:[#allocation5 + %s108]]
        %s110 = scalar_lea.hbm %s1, %s109
        %s111 = scalar_lea.vmem [#allocation2], 3
        %s112 = scalar_lea.sflag [#allocation3], 3
        // Predicated region
        $region25: #{tpu_custom_call.1} parent=11 // pred_check
          _
        $region26: #{tpu_custom_call.1} parent=11 // pred_check_branch
          %114 = sbr.rel target = $region28
        $region27: #{tpu_custom_call.1} parent=11 // pred_region
          %115 = sst [smem:[#allocation10]] [#allocation17]
          %116 = sst [smem:[#allocation11]] [#allocation16]
        $region28: #{tpu_custom_call.1} parent=11 // pred_fallthru
          _
        %118 = shalt.err (0)
        %s120 = sshll.u32 %s110, 4
        %s121 = int_to_ptr.hbm [resolvable:$true] %s120
        %s122 = sshll.u32 %s111, 4
        %s123 = int_to_ptr.vmem [resolvable:$true] %s122
        %125 = dma.hbm_to_vmem [thread:$0]  %s121, 16, %s123, %s112
        %s126 = sadd.s32 %s56, 4
        %s127 = sld [smem:[#allocation5 + %s126]]
        %s128 = scalar_lea.hbm %s1, %s127
        %s129 = scalar_lea.vmem [#allocation2], 4
        %s130 = scalar_lea.sflag [#allocation3], 4
        // Predicated region
        $region29: #{tpu_custom_call.1} parent=11 // pred_check
          _
        $region30: #{tpu_custom_call.1} parent=11 // pred_check_branch
          %132 = sbr.rel target = $region32
        $region31: #{tpu_custom_call.1} parent=11 // pred_region
          %133 = sst [smem:[#allocation10]] [#allocation19]
          %134 = sst [smem:[#allocation11]] [#allocation18]
        $region32: #{tpu_custom_call.1} parent=11 // pred_fallthru
          _
        %136 = shalt.err (0)
        %s138 = sshll.u32 %s128, 4
        %s139 = int_to_ptr.hbm [resolvable:$true] %s138
        %s140 = sshll.u32 %s129, 4
        %s141 = int_to_ptr.vmem [resolvable:$true] %s140
        %143 = dma.hbm_to_vmem [thread:$0]  %s139, 16, %s141, %s130
        %s144 = sadd.s32 %s56, 5
        %s145 = sld [smem:[#allocation5 + %s144]]
        %s146 = scalar_lea.hbm %s1, %s145
        %s147 = scalar_lea.vmem [#allocation2], 5
        %s148 = scalar_lea.sflag [#allocation3], 5
        // Predicated region
        $region33: #{tpu_custom_call.1} parent=11 // pred_check
          _
        $region34: #{tpu_custom_call.1} parent=11 // pred_check_branch
          %150 = sbr.rel target = $region36
        $region35: #{tpu_custom_call.1} parent=11 // pred_region
          %151 = sst [smem:[#allocation10]] [#allocation21]
          %152 = sst [smem:[#allocation11]] [#allocation20]
        $region36: #{tpu_custom_call.1} parent=11 // pred_fallthru
          _
        %154 = shalt.err (0)
        %s156 = sshll.u32 %s146, 4
        %s157 = int_to_ptr.hbm [resolvable:$true] %s156
        %s158 = sshll.u32 %s147, 4
        %s159 = int_to_ptr.vmem [resolvable:$true] %s158
        %161 = dma.hbm_to_vmem [thread:$0]  %s157, 16, %s159, %s148
        %s162 = sadd.s32 %s56, 6
        %s163 = sld [smem:[#allocation5 + %s162]]
        %s164 = scalar_lea.hbm %s1, %s163
        %s165 = scalar_lea.vmem [#allocation2], 6
        %s166 = scalar_lea.sflag [#allocation3], 6
        // Predicated region
        $region37: #{tpu_custom_call.1} parent=11 // pred_check
          _
        $region38: #{tpu_custom_call.1} parent=11 // pred_check_branch
          %168 = sbr.rel target = $region40
        $region39: #{tpu_custom_call.1} parent=11 // pred_region
          %169 = sst [smem:[#allocation10]] [#allocation23]
          %170 = sst [smem:[#allocation11]] [#allocation22]
        $region40: #{tpu_custom_call.1} parent=11 // pred_fallthru
          _
        %172 = shalt.err (0)
        %s174 = sshll.u32 %s164, 4
        %s175 = int_to_ptr.hbm [resolvable:$true] %s174
        %s176 = sshll.u32 %s165, 4
        %s177 = int_to_ptr.vmem [resolvable:$true] %s176
        %179 = dma.hbm_to_vmem [thread:$0]  %s175, 16, %s177, %s166
        %s180 = sadd.s32 %s56, 7
        %s181 = sld [smem:[#allocation5 + %s180]]
        %s182 = scalar_lea.hbm %s1, %s181
        %s183 = scalar_lea.vmem [#allocation2], 7
        %s184 = scalar_lea.sflag [#allocation3], 7
        // Predicated region
        $region41: #{tpu_custom_call.1} parent=11 // pred_check
          _
        $region42: #{tpu_custom_call.1} parent=11 // pred_check_branch
          %186 = sbr.rel target = $region44
        $region43: #{tpu_custom_call.1} parent=11 // pred_region
          %187 = sst [smem:[#allocation10]] [#allocation25]
          %188 = sst [smem:[#allocation11]] [#allocation24]
        $region44: #{tpu_custom_call.1} parent=11 // pred_fallthru
          _
        %190 = shalt.err (0)
        %s192 = sshll.u32 %s182, 4
        %s193 = int_to_ptr.hbm [resolvable:$true] %s192
        %s194 = sshll.u32 %s183, 4
        %s195 = int_to_ptr.vmem [resolvable:$true] %s194
        %197 = dma.hbm_to_vmem [thread:$0]  %s193, 16, %s195, %s184
        loop: start=0, step=1, limit=8
        $region45: #{tpu_custom_call.1} parent=11 // loop_pre_header
          _
        $region46: #{tpu_custom_call.1} parent=11 // loop_header
          %s199 = sphi 0, %s203
          %p200 = scmp.ge.s32.totalorder %s199, 8
        $region47: #{tpu_custom_call.1} parent=11 // loop_header_branch
          %202 = sbr.rel (%p200) target = $region51
        $region48: #{tpu_custom_call.1} parent=11 // loop_body
          %p204 = scmp.lt.s32.totalorder %s199, 0
          %s205 = ssub.s32 0, %s199
          %s206 = scalar_select %p204, %s205, %s199
          %s207 = sand.u32 %s206, 7
          %s208 = ssub.s32 0, %s207
          %s209 = scalar_select %p204, %s208, %s207
          %s210 = sadd.s32 %s56, %s199
          %s211 = sld [smem:[#allocation5 + %s210]]
          %s212 = sadd.s32 %s210, 8
          %p213 = scmp.lt.s32.totalorder %s212, 15
          %s214 = scalar_select %p213, %s212, 15
          %s215 = sld [smem:[#allocation5 + %s214]]
          %s216 = scalar_lea.sflag [#allocation3], %s209
          %s217 = smul.u32 1, 1
          %s218 = sshll.u32 %s217, 4
          %219 = dma.done %s216, %s218
          %s220 = sadd.s32 %s199, 8
          %p221 = scmp.lt.s32.totalorder %s220, 8
          // Predicated region
          $region52: #{tpu_custom_call.1} parent=48 // pred_check
            %p222 = pneg %p221
          $region53: #{tpu_custom_call.1} parent=48 // pred_check_branch
            %224 = sbr.rel (%p222) target = $region55
          $region54: #{tpu_custom_call.1} parent=48 // pred_region
            %s225 = scalar_lea.hbm %s1, %s215
            %s226 = scalar_lea.vmem [#allocation2], %s220
            // Predicated region
            $region56: #{tpu_custom_call.1} parent=54 // pred_check
              _
            $region57: #{tpu_custom_call.1} parent=54 // pred_check_branch
              %228 = sbr.rel target = $region59
            $region58: #{tpu_custom_call.1} parent=54 // pred_region
              %229 = sst [smem:[#allocation10]] [#allocation27]
              %230 = sst [smem:[#allocation11]] [#allocation26]
            $region59: #{tpu_custom_call.1} parent=54 // pred_fallthru
              _
            %232 = shalt.err (0)
            %s234 = sshll.u32 %s225, 4
            %s235 = int_to_ptr.hbm [resolvable:$true] %s234
            %s236 = sshll.u32 %s226, 4
            %s237 = int_to_ptr.vmem [resolvable:$true] %s236
            %239 = dma.hbm_to_vmem [thread:$0]  %s235, 16, %s237, %s216
          $region55: #{tpu_custom_call.1} parent=48 // pred_fallthru
            _
        $region49: #{tpu_custom_call.1} parent=11 // loop_footer
          %s203 = sadd.s32 1, %s199
        $region50: #{tpu_custom_call.1} parent=11 // loop_footer_branch
          %198 = sbr.rel target = $region46
        $region51: #{tpu_custom_call.1} parent=11 // loop_exit
          _
        %v240 = vld [vmem:[#allocation2] sm:$0xff]
        %v241 = vmul.f32 %v240, 11.313708
        %242 = vst [vmem:[%s55] sm:$0xff] %v241
        %s243 = sand.u32 %s28, 1
        %s244 = scalar_lea.sflag [#allocation7], %s243
        %s245 = sand.u32 %s28, 1
        %s246 = smul.addr %s245, 8
        %s247 = scalar_lea.vmem [#allocation6], %s246
        // Predicated region
        $region60: #{tpu_custom_call.1} parent=11 // pred_check
          %p248 = pneg %p34
        $region61: #{tpu_custom_call.1} parent=11 // pred_check_branch
          %250 = sbr.rel (%p248) target = $region63
        $region62: #{tpu_custom_call.1} parent=11 // pred_region
          %252 = vsyncadd %s244, 0
          %s253 = smul.addr %s19, 8
          %s254 = scalar_lea.hbm %s2, %s253
          %s256 = sshll.u32 %s247, 4
          %s257 = int_to_ptr.vmem [resolvable:$true] %s256
          %s258 = sshll.u32 %s254, 4
          %s259 = int_to_ptr.hbm [resolvable:$true] %s258
          %261 = dma.vmem_to_hbm [thread:$0]  %s257, 128, %s259, %s244
        $region63: #{tpu_custom_call.1} parent=11 // pred_fallthru
          _
      $region12: #{tpu_custom_call.1} parent=5 // pred_fallthru
        _
      %p262 = scmp.le.s32.totalorder 1, %s19
      // Predicated region
      $region64: #{tpu_custom_call.1} parent=5 // pred_check
        %p263 = pneg %p262
      $region65: #{tpu_custom_call.1} parent=5 // pred_check_branch
        %265 = sbr.rel (%p263) target = $region67
      $region66: #{tpu_custom_call.1} parent=5 // pred_region
        %s266 = ssub.s32 %s19, 1
        // Predicated region
        $region68: #{tpu_custom_call.1} parent=66 // pred_check
          %p267 = pneg %p40
        $region69: #{tpu_custom_call.1} parent=66 // pred_check_branch
          %269 = sbr.rel (%p267) target = $region71
        $region70: #{tpu_custom_call.1} parent=66 // pred_region
          %s270 = sand.u32 %s31, 1
          %s271 = scalar_lea.sflag [#allocation7], %s270
          %s272 = sand.u32 %s31, 1
          %s273 = smul.addr %s272, 8
          %s274 = scalar_lea.vmem [#allocation6], %s273
          %276 = dma.done %s271, 128
        $region71: #{tpu_custom_call.1} parent=66 // pred_fallthru
          _
      $region67: #{tpu_custom_call.1} parent=5 // pred_fallthru
        _
    $region6: #{tpu_custom_call.1} parent=1 // loop_footer
      %s23 = sadd.s32 1, %s19
    $region7: #{tpu_custom_call.1} parent=1 // loop_footer_branch
      %18 = sbr.rel target = $region3
    $region8: #{tpu_custom_call.1} parent=1 // loop_exit
      _
    %277 = vsyncpa [#allocation7], 1
    %s278 = scalar_lea.sflag [#allocation7], 1
    %279 = vsyncpa %s278, 1
  %280 = vsyncmov [#allocation3]
  %s281 = vpop.sfrf %280
  %p282 = scmp.eq.s32.totalorder %s281, 0
  %p283 = pneg %p282
  %285 = shalt.err (%p283)
  %s286 = scalar_lea.sflag [#allocation3], 1
  %287 = vsyncmov %s286
  %s288 = vpop.sfrf %287
  %p289 = scmp.eq.s32.totalorder %s288, 0
  %p290 = pneg %p289
  %292 = shalt.err (%p290)
  %s293 = scalar_lea.sflag [#allocation3], 2
  %294 = vsyncmov %s293
  %s295 = vpop.sfrf %294
  %p296 = scmp.eq.s32.totalorder %s295, 0
  %p297 = pneg %p296
  %299 = shalt.err (%p297)
  %s300 = scalar_lea.sflag [#allocation3], 3
  %301 = vsyncmov %s300
  %s302 = vpop.sfrf %301
  %p303 = scmp.eq.s32.totalorder %s302, 0
  %p304 = pneg %p303
  %306 = shalt.err (%p304)
  %s307 = scalar_lea.sflag [#allocation3], 4
  %308 = vsyncmov %s307
  %s309 = vpop.sfrf %308
  %p310 = scmp.eq.s32.totalorder %s309, 0
  %p311 = pneg %p310
  %313 = shalt.err (%p311)
  %s314 = scalar_lea.sflag [#allocation3], 5
  %315 = vsyncmov %s314
  %s316 = vpop.sfrf %315
  %p317 = scmp.eq.s32.totalorder %s316, 0
  %p318 = pneg %p317
  %320 = shalt.err (%p318)
  %s321 = scalar_lea.sflag [#allocation3], 6
  %322 = vsyncmov %s321
  %s323 = vpop.sfrf %322
  %p324 = scmp.eq.s32.totalorder %s323, 0
  %p325 = pneg %p324
  %327 = shalt.err (%p325)
  %s328 = scalar_lea.sflag [#allocation3], 7
  %329 = vsyncmov %s328
  %s330 = vpop.sfrf %329
  %p331 = scmp.eq.s32.totalorder %s330, 0
  %p332 = pneg %p331
  %334 = shalt.err (%p332)

</llo_original>
